<compile_context>
chip_gen: v7x
topology: tpu7x:2x2x1
jax: 0.10.0
libtpu: 0.0.40
codegen_flags: <defaults>
</compile_context>

<pallas_src>
import jax
import jax.numpy as jnp
from jax.experimental import pallas as pl
from jax.experimental.pallas import tpu as pltpu


def make_r3flow_kernel(num_hidden):
    """MLP kernel for `num_hidden` hidden Linear+SiLU blocks.

    Ref order: (inp [4,bt], aux [H,6+num_hidden], w_1..w_nh [H,H], w_out [3,H],
                out [3,bt]).  aux columns: 0..3 = W0 columns, 4 = b0,
                5..4+nh = hidden biases, 5+nh = b_out (rows 0..2).
    All activations are feature-major [feat, bt] (batch on the 128-lane axis).
    """

    def kernel(*refs):
        inp_ref, aux_ref = refs[0], refs[1]
        wh_refs = refs[2:2 + num_hidden]
        wo_ref = refs[2 + num_hidden]
        out_ref = refs[3 + num_hidden]

        inp = inp_ref[...]                      # [4, bt]  f32
        aux = aux_ref[...]                      # [H, 6+nh] f32

        # ---- Layer 0 on the VPU: K=4 is too small to justify MXU pushes. ----
        # h0 = W0 @ [x; t] + b0  ==  b0 + sum_k W0[:, k] (outer) inp[k, :]
        h = aux[:, 4:5] + aux[:, 0:1] * inp[0:1, :]
        for k in range(1, 4):
            h = h + aux[:, k:k + 1] * inp[k:k + 1, :]
        h = h * jax.nn.sigmoid(h)               # SiLU, f32 (EUP + VPU)

        # ---- Hidden layers on the MXU (bf16 operands, f32 accumulation). ----
        for l in range(num_hidden):
            w = wh_refs[l][...]                                       # [H, H]
            z = jnp.dot(w, h.astype(w.dtype),
                        preferred_element_type=jnp.float32)           # [H, bt]
            z = z + aux[:, 5 + l:6 + l]
            h = z * jax.nn.sigmoid(z)           # sigmoid kept f32 (v5e-safe)

        # ---- Output projection (M=3, cheap). ----
        wo = wo_ref[...]                                              # [3, H]
        y = jnp.dot(wo, h.astype(wo.dtype),
                    preferred_element_type=jnp.float32)               # [3, bt]
        y = y + aux[:3, 5 + num_hidden:6 + num_hidden]
        out_ref[...] = y.astype(out_ref.dtype)

    return kernel


def init_params(key, hidden_dim=64, num_layers=2, dtype=jnp.float32):
    """Deterministic synthetic parameters (PyTorch nn.Linear uniform init).

    Returns a list of (W[out, in], b[out, 1]) for the layers 4->H, H->H..., H->3.
    """
    dims = [4] + [hidden_dim] * (num_layers + 1) + [3]
    params = []
    for i in range(len(dims) - 1):
        fan_in, fan_out = dims[i], dims[i + 1]
        key, kw, kb = jax.random.split(key, 3)
        bound = 1.0 / (fan_in ** 0.5)
        w = jax.random.uniform(kw, (fan_out, fan_in), dtype, -bound, bound)
        b = jax.random.uniform(kb, (fan_out, 1), dtype, -bound, bound)
        params.append((w, b))
    return params


def r3flow_forward(x, t, params, *, block_b=4096, compute_dtype=jnp.bfloat16):
    """Pallas-backed equivalent of R3FlowModel.forward.

    Args:
      x: [B, 3] float32 points.
      t: [B] or [B, 1] float32 times.
      params: list of (W[out, in], b[out, 1]) for the Linear layers.
      block_b: target batch tile in lanes (multiple of 128; default 4096).
      compute_dtype: MXU operand dtype (default bf16; f32 accumulation, f32
        SiLU/bias always).  Use jnp.float32 for exact parity with PyTorch.

    Returns:
      [B, 3] predicted vector field.
    """
    if t.ndim == 1:
        t = t[:, None]
    B = x.shape[0]
    num_hidden = len(params) - 2
    assert num_hidden >= 0

    w0, b0 = params[0]
    wo, bo = params[-1]
    H = w0.shape[0]
    assert H >= bo.shape[0]

    f32 = jnp.float32
    cast = (lambda w: w) if compute_dtype is None else \
        (lambda w: w.astype(compute_dtype))

    # Pack W0 + all biases into one resident f32 array [H, 6 + num_hidden].
    aux_cols = [w0.astype(f32), b0.astype(f32)]
    for (_, b) in params[1:-1]:
        aux_cols.append(b.astype(f32))
    aux_cols.append(jnp.pad(bo.astype(f32), ((0, H - bo.shape[0]), (0, 0))))
    aux = jnp.concatenate(aux_cols, axis=1)

    weights = [cast(w) for (w, _) in params[1:-1]] + [cast(wo)]

    # ---- Tile selection: batch on the 128-lane axis, feature-major. ----
    LANE = 128
    n_lane_tiles = -(-B // LANE)
    Bp_lane = n_lane_tiles * LANE
    bt = max(LANE, (min(block_b, Bp_lane) // LANE) * LANE)
    if n_lane_tiles >= 2:
        # Keep >= 2 grid steps so "parallel" can use both v7x TensorCores.
        bt = min(bt, (-(-n_lane_tiles // 2)) * LANE)
    Bp = pl.cdiv(Bp_lane, bt) * bt          # pad batch; never shrink the tile
    grid = (Bp // bt,)

    # Fold cat([x, t], dim=1) into one streamed feature-major [4, Bp] input.
    inp = jnp.concatenate([x, t.astype(x.dtype)], axis=1)       # [B, 4]
    inpT = jnp.pad(inp, ((0, Bp - B), (0, 0))).T                 # [4, Bp]

    def stream_spec(rows):
        return pl.BlockSpec((rows, bt), lambda i: (0, i))

    def resident_spec(a):
        # Constant index_map -> stays resident in VMEM across grid steps.
        return pl.BlockSpec(a.shape, lambda i: (0, 0))

    in_specs = [stream_spec(4), resident_spec(aux)] + \
               [resident_spec(w) for w in weights]
    out_specs = stream_spec(3)

    flops = 2 * Bp * (4 * H + num_hidden * H * H + H * 3)
    transcendentals = Bp * H * (num_hidden + 1)
    param_bytes = int(aux.size) * aux.dtype.itemsize + \
        sum(int(w.size) * w.dtype.itemsize for w in weights)
    bytes_accessed = 4 * Bp * (4 + 3) + param_bytes

    out_t = pl.pallas_call(
        make_r3flow_kernel(num_hidden),
        out_shape=jax.ShapeDtypeStruct((3, Bp), x.dtype),
        grid=grid,
        in_specs=in_specs,
        out_specs=out_specs,
        compiler_params=pltpu.CompilerParams(
            dimension_semantics=("parallel",),
            vmem_limit_bytes=64 * 1024 * 1024),
        cost_estimate=pl.CostEstimate(
            flops=flops,
            transcendentals=transcendentals,
            bytes_accessed=bytes_accessed),
    )(inpT, aux, *weights)

    return out_t[:, :B].T                    # [B, 3]


def r3flow_forward_ref(x, t, params):
    """Pure-JAX reference (mirrors the PyTorch module exactly)."""
    if t.ndim == 1:
        t = t[:, None]
    h = jnp.concatenate([x, t.astype(x.dtype)], axis=1)
    for (w, b) in params[:-1]:
        h = jax.nn.silu(h @ w.T + b.T)
    w, b = params[-1]
    return h @ w.T + b.T


if __name__ == "__main__":
    key = jax.random.PRNGKey(0)
    k_params, k_x, k_t = jax.random.split(key, 3)

    hidden_dim, num_layers = 64, 2          # module defaults
    batch = 8

    params = init_params(k_params, hidden_dim=hidden_dim, num_layers=num_layers)

    x = jax.random.normal(k_x, (batch, 3), dtype=jnp.float32)   # [B, 3]
    t = jax.random.uniform(k_t, (batch,), dtype=jnp.float32)    # [B]

    ref = r3flow_forward_ref(x, t, params)

    # f32 MXU operands -> exact parity with the PyTorch module.
    out_f32 = jax.block_until_ready(
        r3flow_forward(x, t, params, compute_dtype=jnp.float32))
    assert out_f32.shape == (batch, 3)
    assert jnp.allclose(out_f32, ref, atol=1e-5, rtol=1e-5), "f32 mismatch"

    # Default path: bf16 MXU operands with f32 accumulation (looser tolerance).
    out_bf16 = jax.block_until_ready(r3flow_forward(x, t, params))
    assert out_bf16.shape == (batch, 3)
    assert jnp.allclose(out_bf16, ref, atol=5e-2, rtol=5e-2), "bf16 mismatch"

    print("KERNEL_OK")
</pallas_src>

<mosaic_0001>
module attributes {stable_mosaic.version = 11 : i64} {
  func.func @kernel(%arg0: i32, %arg1: memref<4x128xf32, #tpu.memory_space<vmem>>, %arg2: memref<64x8xf32, #tpu.memory_space<vmem>>, %arg3: memref<64x64xf32, #tpu.memory_space<vmem>>, %arg4: memref<64x64xf32, #tpu.memory_space<vmem>>, %arg5: memref<3x64xf32, #tpu.memory_space<vmem>>, %arg6: memref<3x128xf32, #tpu.memory_space<vmem>>) attributes {dimension_semantics = [#tpu.dimension_semantics<parallel>], iteration_bounds = array<i64: 1>, scalar_prefetch = 0 : i64, scratch_operands = 0 : i64, tpu.core_type = #tpu.core_type<tc>, window_params = [{transform_indices = @transform_0, window_bounds = array<i64: 4, 128>}, {pipeline_mode = #tpu.pipeline_mode<synchronous>, transform_indices = @transform_1, window_bounds = array<i64: 64, 8>}, {pipeline_mode = #tpu.pipeline_mode<synchronous>, transform_indices = @transform_2, window_bounds = array<i64: 64, 64>}, {pipeline_mode = #tpu.pipeline_mode<synchronous>, transform_indices = @transform_3, window_bounds = array<i64: 64, 64>}, {pipeline_mode = #tpu.pipeline_mode<synchronous>, transform_indices = @transform_4, window_bounds = array<i64: 3, 64>}, {transform_indices = @transform_5, window_bounds = array<i64: 3, 128>}]} {
    %c0 = arith.constant 0 : index
    %c0_0 = arith.constant 0 : index
    %0 = vector.load %arg1[%c0, %c0_0] : memref<4x128xf32, #tpu.memory_space<vmem>>, vector<4x128xf32>
    %c0_1 = arith.constant 0 : index
    %c0_2 = arith.constant 0 : index
    %1 = vector.load %arg2[%c0_1, %c0_2] : memref<64x8xf32, #tpu.memory_space<vmem>>, vector<64x8xf32>
    %2 = vector.extract_strided_slice %1 {offsets = [0, 4], sizes = [64, 1], strides = [1, 1]} : vector<64x8xf32> to vector<64x1xf32>
    %3 = vector.extract_strided_slice %1 {offsets = [0, 0], sizes = [64, 1], strides = [1, 1]} : vector<64x8xf32> to vector<64x1xf32>
    %4 = vector.extract_strided_slice %0 {offsets = [0, 0], sizes = [1, 128], strides = [1, 1]} : vector<4x128xf32> to vector<1x128xf32>
    %5 = vector.broadcast %3 : vector<64x1xf32> to vector<64x128xf32>
    %6 = vector.broadcast %4 : vector<1x128xf32> to vector<64x128xf32>
    %7 = arith.mulf %5, %6 : vector<64x128xf32>
    %8 = vector.broadcast %2 : vector<64x1xf32> to vector<64x128xf32>
    %9 = arith.addf %8, %7 : vector<64x128xf32>
    %10 = vector.extract_strided_slice %1 {offsets = [0, 1], sizes = [64, 1], strides = [1, 1]} : vector<64x8xf32> to vector<64x1xf32>
    %11 = vector.extract_strided_slice %0 {offsets = [1, 0], sizes = [1, 128], strides = [1, 1]} : vector<4x128xf32> to vector<1x128xf32>
    %12 = vector.broadcast %10 : vector<64x1xf32> to vector<64x128xf32>
    %13 = vector.broadcast %11 : vector<1x128xf32> to vector<64x128xf32>
    %14 = arith.mulf %12, %13 : vector<64x128xf32>
    %15 = arith.addf %9, %14 : vector<64x128xf32>
    %16 = vector.extract_strided_slice %1 {offsets = [0, 2], sizes = [64, 1], strides = [1, 1]} : vector<64x8xf32> to vector<64x1xf32>
    %17 = vector.extract_strided_slice %0 {offsets = [2, 0], sizes = [1, 128], strides = [1, 1]} : vector<4x128xf32> to vector<1x128xf32>
    %18 = vector.broadcast %16 : vector<64x1xf32> to vector<64x128xf32>
    %19 = vector.broadcast %17 : vector<1x128xf32> to vector<64x128xf32>
    %20 = arith.mulf %18, %19 : vector<64x128xf32>
    %21 = arith.addf %15, %20 : vector<64x128xf32>
    %22 = vector.extract_strided_slice %1 {offsets = [0, 3], sizes = [64, 1], strides = [1, 1]} : vector<64x8xf32> to vector<64x1xf32>
    %23 = vector.extract_strided_slice %0 {offsets = [3, 0], sizes = [1, 128], strides = [1, 1]} : vector<4x128xf32> to vector<1x128xf32>
    %24 = vector.broadcast %22 : vector<64x1xf32> to vector<64x128xf32>
    %25 = vector.broadcast %23 : vector<1x128xf32> to vector<64x128xf32>
    %26 = arith.mulf %24, %25 : vector<64x128xf32>
    %27 = arith.addf %21, %26 : vector<64x128xf32>
    %28 = arith.negf %27 : vector<64x128xf32>
    %29 = math.exp %28 : vector<64x128xf32>
    %cst = arith.constant 1.000000e+00 : f32
    %30 = vector.broadcast %cst : f32 to vector<64x128xf32>
    %31 = arith.addf %30, %29 : vector<64x128xf32>
    %32 = arith.divf %30, %31 : vector<64x128xf32>
    %33 = arith.mulf %27, %32 : vector<64x128xf32>
    %c0_3 = arith.constant 0 : index
    %c0_4 = arith.constant 0 : index
    %34 = vector.load %arg3[%c0_3, %c0_4] : memref<64x64xf32, #tpu.memory_space<vmem>>, vector<64x64xf32>
    %cst_5 = arith.constant dense<0.000000e+00> : vector<64x128xf32>
    %35 = tpu.matmul %34, %33, %cst_5 {dimension_numbers = #tpu.dot_dimension_numbers<[1], [0], [0], [1], [0, 0, 1, 1], [], []>} : vector<64x64xf32>, vector<64x128xf32>, vector<64x128xf32> -> vector<64x128xf32>
    %36 = vector.extract_strided_slice %1 {offsets = [0, 5], sizes = [64, 1], strides = [1, 1]} : vector<64x8xf32> to vector<64x1xf32>
    %37 = vector.broadcast %36 : vector<64x1xf32> to vector<64x128xf32>
    %38 = arith.addf %35, %37 : vector<64x128xf32>
    %39 = arith.negf %38 : vector<64x128xf32>
    %40 = math.exp %39 : vector<64x128xf32>
    %cst_6 = arith.constant 1.000000e+00 : f32
    %41 = vector.broadcast %cst_6 : f32 to vector<64x128xf32>
    %42 = arith.addf %41, %40 : vector<64x128xf32>
    %43 = arith.divf %41, %42 : vector<64x128xf32>
    %44 = arith.mulf %38, %43 : vector<64x128xf32>
    %c0_7 = arith.constant 0 : index
    %c0_8 = arith.constant 0 : index
    %45 = vector.load %arg4[%c0_7, %c0_8] : memref<64x64xf32, #tpu.memory_space<vmem>>, vector<64x64xf32>
    %cst_9 = arith.constant dense<0.000000e+00> : vector<64x128xf32>
    %46 = tpu.matmul %45, %44, %cst_9 {dimension_numbers = #tpu.dot_dimension_numbers<[1], [0], [0], [1], [0, 0, 1, 1], [], []>} : vector<64x64xf32>, vector<64x128xf32>, vector<64x128xf32> -> vector<64x128xf32>
    %47 = vector.extract_strided_slice %1 {offsets = [0, 6], sizes = [64, 1], strides = [1, 1]} : vector<64x8xf32> to vector<64x1xf32>
    %48 = vector.broadcast %47 : vector<64x1xf32> to vector<64x128xf32>
    %49 = arith.addf %46, %48 : vector<64x128xf32>
    %50 = arith.negf %49 : vector<64x128xf32>
    %51 = math.exp %50 : vector<64x128xf32>
    %cst_10 = arith.constant 1.000000e+00 : f32
    %52 = vector.broadcast %cst_10 : f32 to vector<64x128xf32>
    %53 = arith.addf %52, %51 : vector<64x128xf32>
    %54 = arith.divf %52, %53 : vector<64x128xf32>
    %55 = arith.mulf %49, %54 : vector<64x128xf32>
    %c0_11 = arith.constant 0 : index
    %c0_12 = arith.constant 0 : index
    %56 = vector.load %arg5[%c0_11, %c0_12] : memref<3x64xf32, #tpu.memory_space<vmem>>, vector<3x64xf32>
    %cst_13 = arith.constant dense<0.000000e+00> : vector<3x128xf32>
    %57 = tpu.matmul %56, %55, %cst_13 {dimension_numbers = #tpu.dot_dimension_numbers<[1], [0], [0], [1], [0, 0, 1, 1], [], []>} : vector<3x64xf32>, vector<64x128xf32>, vector<3x128xf32> -> vector<3x128xf32>
    %58 = vector.extract_strided_slice %1 {offsets = [0, 7], sizes = [3, 1], strides = [1, 1]} : vector<64x8xf32> to vector<3x1xf32>
    %59 = vector.broadcast %58 : vector<3x1xf32> to vector<3x128xf32>
    %60 = arith.addf %57, %59 : vector<3x128xf32>
    %c0_14 = arith.constant 0 : index
    %c0_15 = arith.constant 0 : index
    %61 = vector.load %arg6[%c0_14, %c0_15] : memref<3x128xf32, #tpu.memory_space<vmem>>, vector<3x128xf32>
    tpu.vector_store %arg6[%c0_14, %c0_15], %60 {strides = array<i32>} : memref<3x128xf32, #tpu.memory_space<vmem>>, vector<3x128xf32>,
    return
  }
  func.func @transform_0(%arg0: i32) -> (i32, i32) {
    %c0_i32 = arith.constant 0 : i32
    %c0_i32_0 = arith.constant 0 : i32
    return %c0_i32, %arg0 : i32, i32
  }
  func.func @transform_1(%arg0: i32) -> (i32, i32) {
    %c0_i32 = arith.constant 0 : i32
    %c0_i32_0 = arith.constant 0 : i32
    %c0_i32_1 = arith.constant 0 : i32
    return %c0_i32, %c0_i32_0 : i32, i32
  }
  func.func @transform_2(%arg0: i32) -> (i32, i32) {
    %c0_i32 = arith.constant 0 : i32
    %c0_i32_0 = arith.constant 0 : i32
    %c0_i32_1 = arith.constant 0 : i32
    return %c0_i32, %c0_i32_0 : i32, i32
  }
  func.func @transform_3(%arg0: i32) -> (i32, i32) {
    %c0_i32 = arith.constant 0 : i32
    %c0_i32_0 = arith.constant 0 : i32
    %c0_i32_1 = arith.constant 0 : i32
    return %c0_i32, %c0_i32_0 : i32, i32
  }
  func.func @transform_4(%arg0: i32) -> (i32, i32) {
    %c0_i32 = arith.constant 0 : i32
    %c0_i32_0 = arith.constant 0 : i32
    %c0_i32_1 = arith.constant 0 : i32
    return %c0_i32, %c0_i32_0 : i32, i32
  }
  func.func @transform_5(%arg0: i32) -> (i32, i32) {
    %c0_i32 = arith.constant 0 : i32
    %c0_i32_0 = arith.constant 0 : i32
    return %c0_i32, %arg0 : i32, i32
  }
}

</mosaic_0001>

<llo_original>
// kernel: tpu_custom_call.1
$region0: #{tpu_custom_call.1}
  #allocation0 [shape = 'u32[]', space=smem, size = 0x4, offset = 0x4, fixed_abs, tag = 'smem constant byte address 0x4 - core index']
  #allocation1 [shape = 'u32[144,128]{1,0:T(1,128)}', space=vmem, size = 0x12000, scoped, tag = 'internal scratch']
  %s0 = inlined_call_operand.hbm [shape: f32[4,128], index: 0, kind: input, shape index: {}]
  %s1 = inlined_call_operand.hbm [shape: f32[64,8], index: 1, kind: input, shape index: {}]
  %s2 = inlined_call_operand.hbm [shape: f32[64,64], index: 2, kind: input, shape index: {}]
  %s3 = inlined_call_operand.hbm [shape: f32[64,64], index: 3, kind: input, shape index: {}]
  %s4 = inlined_call_operand.hbm [shape: f32[3,64], index: 4, kind: input, shape index: {}]
  %s5 = inlined_call_operand.hbm [shape: f32[3,128], index: 5, kind: output, shape index: {}]
  %s6 = sld [smem:[#allocation0]]
  $region50: #{tpu_custom_call.1} parent=0
    _
  %s8 = ssub.s32 1, %s6
  %s9 = scalar_select 0, %s8, %s6
  $region1: #{tpu_custom_call.1} parent=0
    #allocation2 [shape = 'u8[2048]{0}', space=vmem, size = 0x800, scoped, tag = 'input window, operand 0, single buffered']
    #allocation3 [shape = 's32[1]{0}', space=sflag, size = 0x4, scoped, tag = 'scoped memory for tpu_custom_call.1']
    #allocation4 [shape = 's32[1]{0}', space=sflag, size = 0x4, scoped, tag = 'scoped memory for tpu_custom_call.1']
    #allocation5 [shape = 'u8[32768]{0}', space=vmem, size = 0x8000, scoped, tag = 'input window, operand 1, single buffered']
    #allocation6 [shape = 's32[1]{0}', space=sflag, size = 0x4, scoped, tag = 'scoped memory for tpu_custom_call.1']
    #allocation7 [shape = 'u8[32768]{0}', space=vmem, size = 0x8000, scoped, tag = 'input window, operand 2, single buffered']
    #allocation8 [shape = 'u8[32768]{0}', space=vmem, size = 0x8000, scoped, tag = 'input window, operand 3, single buffered']
    #allocation9 [shape = 's32[1]{0}', space=sflag, size = 0x4, scoped, tag = 'scoped memory for tpu_custom_call.1']
    #allocation10 [shape = 'u8[2048]{0}', space=vmem, size = 0x800, scoped, tag = 'input window, operand 4, single buffered']
    #allocation11 [shape = 'u8[2048]{0}', space=vmem, size = 0x800, scoped, tag = 'output window, operand 0, single buffered']
    %10 = vsyncpa [#allocation3], 0
    %11 = vsyncpa [#allocation6], 0
    %12 = vsyncpa [#allocation9], 0
    %13 = vsyncpa [#allocation4], 0
    // Predicated region
    $region2: #{tpu_custom_call.1} parent=1 // pred_check
      _
    $region3: #{tpu_custom_call.1} parent=1 // pred_check_branch
      %15 = sbr.rel (0) target = $region5
    $region4: #{tpu_custom_call.1} parent=1 // pred_region
      %s17 = ssub.s32 64, 64
      %18 = vsyncadd [#allocation3], %s17
      %s20 = sshll.u32 [#allocation2], 4
      %s21 = int_to_ptr.vmem [resolvable:$true] %s20
      %23 = dma.hbm_to_vmem [thread:$0]  %s0, 64, %s21, [#allocation3]
    $region5: #{tpu_custom_call.1} parent=1 // pred_fallthru
      _
    // Predicated region
    $region6: #{tpu_custom_call.1} parent=1 // pred_check
      _
    $region7: #{tpu_custom_call.1} parent=1 // pred_check_branch
      %25 = sbr.rel (0) target = $region9
    $region8: #{tpu_custom_call.1} parent=1 // pred_region
      %s27 = ssub.s32 1024, 1024
      %28 = vsyncadd [#allocation6], %s27
      %s29 = sshll.u32 [#allocation5], 4
      %s30 = int_to_ptr.vmem [resolvable:$true] %s29
      %35 = dma.hbm_to_vmem [thread:$0]  %s1, 1024, %s30, [#allocation6], 128, 128, 8
    $region9: #{tpu_custom_call.1} parent=1 // pred_fallthru
      _
    // Predicated region
    $region10: #{tpu_custom_call.1} parent=1 // pred_check
      _
    $region11: #{tpu_custom_call.1} parent=1 // pred_check_branch
      %37 = sbr.rel (0) target = $region13
    $region12: #{tpu_custom_call.1} parent=1 // pred_region
      %s39 = ssub.s32 1024, 1024
      %40 = vsyncadd [#allocation6], %s39
      %s41 = sshll.u32 [#allocation7], 4
      %s42 = int_to_ptr.vmem [resolvable:$true] %s41
      %47 = dma.hbm_to_vmem [thread:$0]  %s2, 1024, %s42, [#allocation6], 128, 128, 8
    $region13: #{tpu_custom_call.1} parent=1 // pred_fallthru
      _
    // Predicated region
    $region14: #{tpu_custom_call.1} parent=1 // pred_check
      _
    $region15: #{tpu_custom_call.1} parent=1 // pred_check_branch
      %49 = sbr.rel (0) target = $region17
    $region16: #{tpu_custom_call.1} parent=1 // pred_region
      %s51 = ssub.s32 1024, 1024
      %52 = vsyncadd [#allocation9], %s51
      %s53 = sshll.u32 [#allocation8], 4
      %s54 = int_to_ptr.vmem [resolvable:$true] %s53
      %59 = dma.hbm_to_vmem [thread:$0]  %s3, 1024, %s54, [#allocation9], 128, 128, 8
    $region17: #{tpu_custom_call.1} parent=1 // pred_fallthru
      _
    // Predicated region
    $region18: #{tpu_custom_call.1} parent=1 // pred_check
      _
    $region19: #{tpu_custom_call.1} parent=1 // pred_check_branch
      %61 = sbr.rel (0) target = $region21
    $region20: #{tpu_custom_call.1} parent=1 // pred_region
      %s63 = ssub.s32 64, 64
      %64 = vsyncadd [#allocation9], %s63
      %s66 = sshll.u32 [#allocation10], 4
      %s67 = int_to_ptr.vmem [resolvable:$true] %s66
      %69 = dma.hbm_to_vmem [thread:$0]  %s4, 64, %s67, [#allocation9]
    $region21: #{tpu_custom_call.1} parent=1 // pred_fallthru
      _
    // Predicated region
    $region22: #{tpu_custom_call.1} parent=1 // pred_check
      _
    $region23: #{tpu_custom_call.1} parent=1 // pred_check_branch
      %71 = sbr.rel (0) target = $region25
    $region24: #{tpu_custom_call.1} parent=1 // pred_region
      %72 = dma.done [#allocation3], 64
    $region25: #{tpu_custom_call.1} parent=1 // pred_fallthru
      _
    // Predicated region
    $region26: #{tpu_custom_call.1} parent=1 // pred_check
      _
    $region27: #{tpu_custom_call.1} parent=1 // pred_check_branch
      %74 = sbr.rel (0) target = $region29
    $region28: #{tpu_custom_call.1} parent=1 // pred_region
      %75 = dma.done [#allocation6], 1024
    $region29: #{tpu_custom_call.1} parent=1 // pred_fallthru
      _
    // Predicated region
    $region30: #{tpu_custom_call.1} parent=1 // pred_check
      _
    $region31: #{tpu_custom_call.1} parent=1 // pred_check_branch
      %77 = sbr.rel (0) target = $region33
    $region32: #{tpu_custom_call.1} parent=1 // pred_region
      %78 = dma.done [#allocation6], 1024
    $region33: #{tpu_custom_call.1} parent=1 // pred_fallthru
      _
    // Predicated region
    $region34: #{tpu_custom_call.1} parent=1 // pred_check
      _
    $region35: #{tpu_custom_call.1} parent=1 // pred_check_branch
      %80 = sbr.rel (0) target = $region37
    $region36: #{tpu_custom_call.1} parent=1 // pred_region
      %81 = dma.done [#allocation9], 1024
    $region37: #{tpu_custom_call.1} parent=1 // pred_fallthru
      _
    // Predicated region
    $region38: #{tpu_custom_call.1} parent=1 // pred_check
      _
    $region39: #{tpu_custom_call.1} parent=1 // pred_check_branch
      %83 = sbr.rel (0) target = $region41
    $region40: #{tpu_custom_call.1} parent=1 // pred_region
      %84 = dma.done [#allocation9], 64
    $region41: #{tpu_custom_call.1} parent=1 // pred_fallthru
      _
    %v85 = vld [vmem:[#allocation2] sm:$0xf]
    %v86 = vld [vmem:[#allocation5] sm:$0xff]
    %v87 = vld [vmem:[#allocation5 + $0x8] sm:$0xff]
    %v88 = vld [vmem:[#allocation5 + $0x10] sm:$0xff]
    %v89 = vld [vmem:[#allocation5 + $0x18] sm:$0xff]
    %v90 = vld [vmem:[#allocation5 + $0x20] sm:$0xff]
    %v91 = vld [vmem:[#allocation5 + $0x28] sm:$0xff]
    %v92 = vld [vmem:[#allocation5 + $0x30] sm:$0xff]
    %v93 = vld [vmem:[#allocation5 + $0x38] sm:$0xff]
    %95 = vset.pattern.permute.xlu0 0
    %96 = vperm.xlu0 %95, %v86
    %v97 = vpop.permute.xlu0 %96
    %100 = vset.pattern.permute.xlu0 0
    %101 = vperm.xlu0 %100, %v87
    %v102 = vpop.permute.xlu0 %101
    %105 = vset.pattern.permute.xlu0 0
    %106 = vperm.xlu0 %105, %v88
    %v107 = vpop.permute.xlu0 %106
    %110 = vset.pattern.permute.xlu0 0
    %111 = vperm.xlu0 %110, %v89
    %v112 = vpop.permute.xlu0 %111
    %115 = vset.pattern.permute.xlu0 0
    %116 = vperm.xlu0 %115, %v90
    %v117 = vpop.permute.xlu0 %116
    %120 = vset.pattern.permute.xlu0 0
    %121 = vperm.xlu0 %120, %v91
    %v122 = vpop.permute.xlu0 %121
    %125 = vset.pattern.permute.xlu0 0
    %126 = vperm.xlu0 %125, %v92
    %v127 = vpop.permute.xlu0 %126
    %130 = vset.pattern.permute.xlu0 0
    %131 = vperm.xlu0 %130, %v93
    %v132 = vpop.permute.xlu0 %131
    %v134 = vlaneseq
    %v135 = vshrl.u32 %v134, 7
    %v136 = vsub.s32 0, %v135
    %v137 = vrot.slane %v85, %v136
    %v138 = vmul.f32 %v97, %v137
    %v139 = vmul.f32 %v102, %v137
    %v140 = vmul.f32 %v107, %v137
    %v141 = vmul.f32 %v112, %v137
    %v142 = vmul.f32 %v117, %v137
    %v143 = vmul.f32 %v122, %v137
    %v144 = vmul.f32 %v127, %v137
    %v145 = vmul.f32 %v132, %v137
    %146 = vset.pattern.permute.xlu0 4
    %147 = vperm.xlu0 %146, %v86
    %v148 = vpop.permute.xlu0 %147
    %150 = vset.pattern.permute.xlu0 4
    %151 = vperm.xlu0 %150, %v87
    %v152 = vpop.permute.xlu0 %151
    %154 = vset.pattern.permute.xlu0 4
    %155 = vperm.xlu0 %154, %v88
    %v156 = vpop.permute.xlu0 %155
    %158 = vset.pattern.permute.xlu0 4
    %159 = vperm.xlu0 %158, %v89
    %v160 = vpop.permute.xlu0 %159
    %162 = vset.pattern.permute.xlu0 4
    %163 = vperm.xlu0 %162, %v90
    %v164 = vpop.permute.xlu0 %163
    %166 = vset.pattern.permute.xlu0 4
    %167 = vperm.xlu0 %166, %v91
    %v168 = vpop.permute.xlu0 %167
    %170 = vset.pattern.permute.xlu0 4
    %171 = vperm.xlu0 %170, %v92
    %v172 = vpop.permute.xlu0 %171
    %174 = vset.pattern.permute.xlu0 4
    %175 = vperm.xlu0 %174, %v93
    %v176 = vpop.permute.xlu0 %175
    %v178 = vadd.f32 %v148, %v138
    %v179 = vadd.f32 %v152, %v139
    %v180 = vadd.f32 %v156, %v140
    %v181 = vadd.f32 %v160, %v141
    %v182 = vadd.f32 %v164, %v142
    %v183 = vadd.f32 %v168, %v143
    %v184 = vadd.f32 %v172, %v144
    %v185 = vadd.f32 %v176, %v145
    %186 = vset.pattern.permute.xlu0 1
    %187 = vperm.xlu0 %186, %v86
    %v188 = vpop.permute.xlu0 %187
    %190 = vset.pattern.permute.xlu0 1
    %191 = vperm.xlu0 %190, %v87
    %v192 = vpop.permute.xlu0 %191
    %194 = vset.pattern.permute.xlu0 1
    %195 = vperm.xlu0 %194, %v88
    %v196 = vpop.permute.xlu0 %195
    %198 = vset.pattern.permute.xlu0 1
    %199 = vperm.xlu0 %198, %v89
    %v200 = vpop.permute.xlu0 %199
    %202 = vset.pattern.permute.xlu0 1
    %203 = vperm.xlu0 %202, %v90
    %v204 = vpop.permute.xlu0 %203
    %206 = vset.pattern.permute.xlu0 1
    %207 = vperm.xlu0 %206, %v91
    %v208 = vpop.permute.xlu0 %207
    %210 = vset.pattern.permute.xlu0 1
    %211 = vperm.xlu0 %210, %v92
    %v212 = vpop.permute.xlu0 %211
    %214 = vset.pattern.permute.xlu0 1
    %215 = vperm.xlu0 %214, %v93
    %v216 = vpop.permute.xlu0 %215
    %v218 = vlaneseq
    %v219 = vshrl.u32 %v218, 7
    %v220 = vsub.s32 1, %v219
    %v221 = vrot.slane %v85, %v220
    %v222 = vmul.f32 %v188, %v221
    %v223 = vmul.f32 %v192, %v221
    %v224 = vmul.f32 %v196, %v221
    %v225 = vmul.f32 %v200, %v221
    %v226 = vmul.f32 %v204, %v221
    %v227 = vmul.f32 %v208, %v221
    %v228 = vmul.f32 %v212, %v221
    %v229 = vmul.f32 %v216, %v221
    %v230 = vadd.f32 %v178, %v222
    %v231 = vadd.f32 %v179, %v223
    %v232 = vadd.f32 %v180, %v224
    %v233 = vadd.f32 %v181, %v225
    %v234 = vadd.f32 %v182, %v226
    %v235 = vadd.f32 %v183, %v227
    %v236 = vadd.f32 %v184, %v228
    %v237 = vadd.f32 %v185, %v229
    %238 = vset.pattern.permute.xlu0 2
    %239 = vperm.xlu0 %238, %v86
    %v240 = vpop.permute.xlu0 %239
    %242 = vset.pattern.permute.xlu0 2
    %243 = vperm.xlu0 %242, %v87
    %v244 = vpop.permute.xlu0 %243
    %246 = vset.pattern.permute.xlu0 2
    %247 = vperm.xlu0 %246, %v88
    %v248 = vpop.permute.xlu0 %247
    %250 = vset.pattern.permute.xlu0 2
    %251 = vperm.xlu0 %250, %v89
    %v252 = vpop.permute.xlu0 %251
    %254 = vset.pattern.permute.xlu0 2
    %255 = vperm.xlu0 %254, %v90
    %v256 = vpop.permute.xlu0 %255
    %258 = vset.pattern.permute.xlu0 2
    %259 = vperm.xlu0 %258, %v91
    %v260 = vpop.permute.xlu0 %259
    %262 = vset.pattern.permute.xlu0 2
    %263 = vperm.xlu0 %262, %v92
    %v264 = vpop.permute.xlu0 %263
    %266 = vset.pattern.permute.xlu0 2
    %267 = vperm.xlu0 %266, %v93
    %v268 = vpop.permute.xlu0 %267
    %v270 = vlaneseq
    %v271 = vshrl.u32 %v270, 7
    %v272 = vsub.s32 2, %v271
    %v273 = vrot.slane %v85, %v272
    %v274 = vmul.f32 %v240, %v273
    %v275 = vmul.f32 %v244, %v273
    %v276 = vmul.f32 %v248, %v273
    %v277 = vmul.f32 %v252, %v273
    %v278 = vmul.f32 %v256, %v273
    %v279 = vmul.f32 %v260, %v273
    %v280 = vmul.f32 %v264, %v273
    %v281 = vmul.f32 %v268, %v273
    %v282 = vadd.f32 %v230, %v274
    %v283 = vadd.f32 %v231, %v275
    %v284 = vadd.f32 %v232, %v276
    %v285 = vadd.f32 %v233, %v277
    %v286 = vadd.f32 %v234, %v278
    %v287 = vadd.f32 %v235, %v279
    %v288 = vadd.f32 %v236, %v280
    %v289 = vadd.f32 %v237, %v281
    %290 = vset.pattern.permute.xlu0 3
    %291 = vperm.xlu0 %290, %v86
    %v292 = vpop.permute.xlu0 %291
    %294 = vset.pattern.permute.xlu0 3
    %295 = vperm.xlu0 %294, %v87
    %v296 = vpop.permute.xlu0 %295
    %298 = vset.pattern.permute.xlu0 3
    %299 = vperm.xlu0 %298, %v88
    %v300 = vpop.permute.xlu0 %299
    %302 = vset.pattern.permute.xlu0 3
    %303 = vperm.xlu0 %302, %v89
    %v304 = vpop.permute.xlu0 %303
    %306 = vset.pattern.permute.xlu0 3
    %307 = vperm.xlu0 %306, %v90
    %v308 = vpop.permute.xlu0 %307
    %310 = vset.pattern.permute.xlu0 3
    %311 = vperm.xlu0 %310, %v91
    %v312 = vpop.permute.xlu0 %311
    %314 = vset.pattern.permute.xlu0 3
    %315 = vperm.xlu0 %314, %v92
    %v316 = vpop.permute.xlu0 %315
    %318 = vset.pattern.permute.xlu0 3
    %319 = vperm.xlu0 %318, %v93
    %v320 = vpop.permute.xlu0 %319
    %v322 = vlaneseq
    %v323 = vshrl.u32 %v322, 7
    %v324 = vsub.s32 3, %v323
    %v325 = vrot.slane %v85, %v324
    %v326 = vmul.f32 %v292, %v325
    %v327 = vmul.f32 %v296, %v325
    %v328 = vmul.f32 %v300, %v325
    %v329 = vmul.f32 %v304, %v325
    %v330 = vmul.f32 %v308, %v325
    %v331 = vmul.f32 %v312, %v325
    %v332 = vmul.f32 %v316, %v325
    %v333 = vmul.f32 %v320, %v325
    %v334 = vadd.f32 %v282, %v326
    %v335 = vadd.f32 %v283, %v327
    %v336 = vadd.f32 %v284, %v328
    %v337 = vadd.f32 %v285, %v329
    %v338 = vadd.f32 %v286, %v330
    %v339 = vadd.f32 %v287, %v331
    %v340 = vadd.f32 %v288, %v332
    %v341 = vadd.f32 %v289, %v333
    %v342 = vxor.u32 %v334, 2147483648
    %v343 = vxor.u32 %v335, 2147483648
    %v344 = vxor.u32 %v336, 2147483648
    %v345 = vxor.u32 %v337, 2147483648
    %v346 = vxor.u32 %v338, 2147483648
    %v347 = vxor.u32 %v339, 2147483648
    %v348 = vxor.u32 %v340, 2147483648
    %v349 = vxor.u32 %v341, 2147483648
    %v350 = vmul.f32 %v342, 1.442695
    %v351 = vpow.pop %v350
    %v352 = vmul.f32 %v343, 1.442695
    %v353 = vpow.pop %v352
    %v354 = vmul.f32 %v344, 1.442695
    %v355 = vpow.pop %v354
    %v356 = vmul.f32 %v345, 1.442695
    %v357 = vpow.pop %v356
    %v358 = vmul.f32 %v346, 1.442695
    %v359 = vpow.pop %v358
    %v360 = vmul.f32 %v347, 1.442695
    %v361 = vpow.pop %v360
    %v362 = vmul.f32 %v348, 1.442695
    %v363 = vpow.pop %v362
    %v364 = vmul.f32 %v349, 1.442695
    %v365 = vpow.pop %v364
    %v366 = vadd.f32 %v351, 1.0
    %v367 = vadd.f32 %v353, 1.0
    %v368 = vadd.f32 %v355, 1.0
    %v369 = vadd.f32 %v357, 1.0
    %v370 = vadd.f32 %v359, 1.0
    %v371 = vadd.f32 %v361, 1.0
    %v372 = vadd.f32 %v363, 1.0
    %v373 = vadd.f32 %v365, 1.0
    %v374 = vrcp.pop %v366
    %v375 = vmul.f32 1.0, %v374
    %v376 = vrcp.pop %v367
    %v377 = vmul.f32 1.0, %v376
    %v378 = vrcp.pop %v368
    %v379 = vmul.f32 1.0, %v378
    %v380 = vrcp.pop %v369
    %v381 = vmul.f32 1.0, %v380
    %v382 = vrcp.pop %v370
    %v383 = vmul.f32 1.0, %v382
    %v384 = vrcp.pop %v371
    %v385 = vmul.f32 1.0, %v384
    %v386 = vrcp.pop %v372
    %v387 = vmul.f32 1.0, %v386
    %v388 = vrcp.pop %v373
    %v389 = vmul.f32 1.0, %v388
    %v390 = vmul.f32 %v334, %v375
    %v391 = vmul.f32 %v335, %v377
    %v392 = vmul.f32 %v336, %v379
    %v393 = vmul.f32 %v337, %v381
    %v394 = vmul.f32 %v338, %v383
    %v395 = vmul.f32 %v339, %v385
    %v396 = vmul.f32 %v340, %v387
    %v397 = vmul.f32 %v341, %v389
    %v398 = vld [vmem:[#allocation7] sm:$0xff]
    %v399 = vld [vmem:[#allocation7 + $0x8] sm:$0xff]
    %v400 = vld [vmem:[#allocation7 + $0x10] sm:$0xff]
    %v401 = vld [vmem:[#allocation7 + $0x18] sm:$0xff]
    %v402 = vld [vmem:[#allocation7 + $0x20] sm:$0xff]
    %v403 = vld [vmem:[#allocation7 + $0x28] sm:$0xff]
    %v404 = vld [vmem:[#allocation7 + $0x30] sm:$0xff]
    %v405 = vld [vmem:[#allocation7 + $0x38] sm:$0xff]
    %406 = vset.pattern.permute.xlu0 5
    %407 = vperm.xlu0 %406, %v86
    %v408 = vpop.permute.xlu0 %407
    %410 = vset.pattern.permute.xlu0 5
    %411 = vperm.xlu0 %410, %v87
    %v412 = vpop.permute.xlu0 %411
    %414 = vset.pattern.permute.xlu0 5
    %415 = vperm.xlu0 %414, %v88
    %v416 = vpop.permute.xlu0 %415
    %418 = vset.pattern.permute.xlu0 5
    %419 = vperm.xlu0 %418, %v89
    %v420 = vpop.permute.xlu0 %419
    %422 = vset.pattern.permute.xlu0 5
    %423 = vperm.xlu0 %422, %v90
    %v424 = vpop.permute.xlu0 %423
    %426 = vset.pattern.permute.xlu0 5
    %427 = vperm.xlu0 %426, %v91
    %v428 = vpop.permute.xlu0 %427
    %430 = vset.pattern.permute.xlu0 5
    %431 = vperm.xlu0 %430, %v92
    %v432 = vpop.permute.xlu0 %431
    %434 = vset.pattern.permute.xlu0 5
    %435 = vperm.xlu0 %434, %v93
    %v436 = vpop.permute.xlu0 %435
    %vm438 = vcmask 523264
    %v440 = vsel %vm438, %v398, 0
    %v443 = vsel %vm438, %v399, 0
    %v446 = vsel %vm438, %v400, 0
    %v449 = vsel %vm438, %v401, 0
    %v452 = vsel %vm438, %v402, 0
    %v455 = vsel %vm438, %v403, 0
    %v458 = vsel %vm438, %v404, 0
    %v461 = vsel %vm438, %v405, 0
    %463 = vmatprep.subr.mxu0 0.0
    %464 = vmatpush1.msra.mxu0 %v390
    %465 = vmatprep.subr.mxu0 0.0
    %466 = vmatpush1.msra.mxu0 %v391
    %467 = vmatprep.subr.mxu0 0.0
    %468 = vmatpush1.msra.mxu0 %v392
    %469 = vmatprep.subr.mxu0 0.0
    %470 = vmatpush1.msra.mxu0 %v393
    %471 = vmatprep.subr.mxu0 0.0
    %472 = vmatpush1.msra.mxu0 %v394
    %473 = vmatprep.subr.mxu0 0.0
    %474 = vmatpush1.msra.mxu0 %v395
    %475 = vmatprep.subr.mxu0 0.0
    %476 = vmatpush1.msra.mxu0 %v396
    %477 = vmatprep.subr.mxu0 0.0
    %478 = vmatpush1.msra.mxu0 %v397
    %479 = vmatprep.subr.mxu0 0.0
    %480 = vmatpush1.msra.mxu0 0.0
    %481 = vmatprep.subr.mxu0 0.0
    %482 = vmatpush1.msra.mxu0 0.0
    %483 = vmatprep.subr.mxu0 0.0
    %484 = vmatpush1.msra.mxu0 0.0
    %485 = vmatprep.subr.mxu0 0.0
    %486 = vmatpush1.msra.mxu0 0.0
    %487 = vmatprep.subr.mxu0 0.0
    %488 = vmatpush1.msra.mxu0 0.0
    %489 = vmatprep.subr.mxu0 0.0
    %490 = vmatpush1.msra.mxu0 0.0
    %491 = vmatprep.subr.mxu0 0.0
    %492 = vmatpush1.msra.mxu0 0.0
    %493 = vmatprep.subr.mxu0 0.0
    %494 = vmatpush1.msra.mxu0 0.0
    %495 = vmatprep.subr.mxu0 0.0
    %496 = vmatpush1.msra.mxu0 0.0
    %497 = vmatprep.subr.mxu0 0.0
    %498 = vmatpush1.msra.mxu0 0.0
    %499 = vmatprep.subr.mxu0 0.0
    %500 = vmatpush1.msra.mxu0 0.0
    %501 = vmatprep.subr.mxu0 0.0
    %502 = vmatpush1.msra.mxu0 0.0
    %503 = vmatprep.subr.mxu0 0.0
    %504 = vmatpush1.msra.mxu0 0.0
    %505 = vmatprep.subr.mxu0 0.0
    %506 = vmatpush1.msra.mxu0 0.0
    %507 = vmatprep.subr.mxu0 0.0
    %508 = vmatpush1.msra.mxu0 0.0
    %509 = vmatprep.subr.mxu0 0.0
    %510 = vmatpush1.msra.mxu0 0.0
    %511 = vmatprep.subr.mxu0 0.0
    %512 = vmatpush1.msra.mxu0 0.0
    %513 = vmatprep.subr.mxu0 0.0
    %514 = vmatpush1.msra.mxu0 0.0
    %515 = vmatprep.subr.mxu0 0.0
    %516 = vmatpush1.msra.mxu0 0.0
    %517 = vmatprep.subr.mxu0 0.0
    %518 = vmatpush1.msra.mxu0 0.0
    %519 = vmatprep.subr.mxu0 0.0
    %520 = vmatpush1.msra.mxu0 0.0
    %521 = vmatprep.subr.mxu0 0.0
    %522 = vmatpush1.msra.mxu0 0.0
    %523 = vmatprep.subr.mxu0 0.0
    %524 = vmatpush1.msra.mxu0 0.0
    %525 = vmatprep.subr.mxu0 0.0
    %526 = vmatpush1.msra.mxu0 0.0
    %527 = vmatprep.mubr.f32.mxu0 0.0
    %528 = vmatmul.mubr.f32.gmra.mrb[0].mxu0 %v440
    %v529 = vpop.f32.mrb[0].mxu0
    %v530 = vadd.f32 %v408, %v529
    %v531 = vpop.f32.mrb[0].mxu0
    %532 = vmatprep.mubr.f32.mxu0 0.0
    %533 = vmatmul.mubr.f32.gmra.mrb[0].mxu0 %v443
    %v534 = vpop.f32.mrb[0].mxu0
    %v535 = vadd.f32 %v412, %v534
    %v536 = vpop.f32.mrb[0].mxu0
    %537 = vmatprep.mubr.f32.mxu0 0.0
    %538 = vmatmul.mubr.f32.gmra.mrb[0].mxu0 %v446
    %v539 = vpop.f32.mrb[0].mxu0
    %v540 = vadd.f32 %v416, %v539
    %v541 = vpop.f32.mrb[0].mxu0
    %542 = vmatprep.mubr.f32.mxu0 0.0
    %543 = vmatmul.mubr.f32.gmra.mrb[0].mxu0 %v449
    %v544 = vpop.f32.mrb[0].mxu0
    %v545 = vadd.f32 %v420, %v544
    %v546 = vpop.f32.mrb[0].mxu0
    %547 = vmatprep.mubr.f32.mxu0 0.0
    %548 = vmatmul.mubr.f32.gmra.mrb[0].mxu0 %v452
    %v549 = vpop.f32.mrb[0].mxu0
    %v550 = vadd.f32 %v424, %v549
    %v551 = vpop.f32.mrb[0].mxu0
    %552 = vmatprep.mubr.f32.mxu0 0.0
    %553 = vmatmul.mubr.f32.gmra.mrb[0].mxu0 %v455
    %v554 = vpop.f32.mrb[0].mxu0
    %v555 = vadd.f32 %v428, %v554
    %v556 = vpop.f32.mrb[0].mxu0
    %557 = vmatprep.mubr.f32.mxu0 0.0
    %558 = vmatmul.mubr.f32.gmra.mrb[0].mxu0 %v458
    %v559 = vpop.f32.mrb[0].mxu0
    %v560 = vadd.f32 %v432, %v559
    %v561 = vpop.f32.mrb[0].mxu0
    %562 = vmatprep.mubr.f32.mxu0 0.0
    %563 = vmatmul.mubr.f32.gmra.mrb[0].mxu0 %v461
    %v564 = vpop.f32.mrb[0].mxu0
    %v565 = vadd.f32 %v436, %v564
    %v566 = vpop.f32.mrb[0].mxu0
    %567 = vdwg.mxu0
    %v568 = vxor.u32 %v530, 2147483648
    %v569 = vxor.u32 %v535, 2147483648
    %v570 = vxor.u32 %v540, 2147483648
    %v571 = vxor.u32 %v545, 2147483648
    %v572 = vxor.u32 %v550, 2147483648
    %v573 = vxor.u32 %v555, 2147483648
    %v574 = vxor.u32 %v560, 2147483648
    %v575 = vxor.u32 %v565, 2147483648
    %v576 = vmul.f32 %v568, 1.442695
    %v577 = vpow.pop %v576
    %v578 = vmul.f32 %v569, 1.442695
    %v579 = vpow.pop %v578
    %v580 = vmul.f32 %v570, 1.442695
    %v581 = vpow.pop %v580
    %v582 = vmul.f32 %v571, 1.442695
    %v583 = vpow.pop %v582
    %v584 = vmul.f32 %v572, 1.442695
    %v585 = vpow.pop %v584
    %v586 = vmul.f32 %v573, 1.442695
    %v587 = vpow.pop %v586
    %v588 = vmul.f32 %v574, 1.442695
    %v589 = vpow.pop %v588
    %v590 = vmul.f32 %v575, 1.442695
    %v591 = vpow.pop %v590
    %v592 = vadd.f32 %v577, 1.0
    %v593 = vadd.f32 %v579, 1.0
    %v594 = vadd.f32 %v581, 1.0
    %v595 = vadd.f32 %v583, 1.0
    %v596 = vadd.f32 %v585, 1.0
    %v597 = vadd.f32 %v587, 1.0
    %v598 = vadd.f32 %v589, 1.0
    %v599 = vadd.f32 %v591, 1.0
    %v600 = vrcp.pop %v592
    %v601 = vmul.f32 1.0, %v600
    %v602 = vrcp.pop %v593
    %v603 = vmul.f32 1.0, %v602
    %v604 = vrcp.pop %v594
    %v605 = vmul.f32 1.0, %v604
    %v606 = vrcp.pop %v595
    %v607 = vmul.f32 1.0, %v606
    %v608 = vrcp.pop %v596
    %v609 = vmul.f32 1.0, %v608
    %v610 = vrcp.pop %v597
    %v611 = vmul.f32 1.0, %v610
    %v612 = vrcp.pop %v598
    %v613 = vmul.f32 1.0, %v612
    %v614 = vrcp.pop %v599
    %v615 = vmul.f32 1.0, %v614
    %v616 = vmul.f32 %v530, %v601
    %v617 = vmul.f32 %v535, %v603
    %v618 = vmul.f32 %v540, %v605
    %v619 = vmul.f32 %v545, %v607
    %v620 = vmul.f32 %v550, %v609
    %v621 = vmul.f32 %v555, %v611
    %v622 = vmul.f32 %v560, %v613
    %v623 = vmul.f32 %v565, %v615
    %v624 = vld [vmem:[#allocation8] sm:$0xff]
    %v625 = vld [vmem:[#allocation8 + $0x8] sm:$0xff]
    %v626 = vld [vmem:[#allocation8 + $0x10] sm:$0xff]
    %v627 = vld [vmem:[#allocation8 + $0x18] sm:$0xff]
    %v628 = vld [vmem:[#allocation8 + $0x20] sm:$0xff]
    %v629 = vld [vmem:[#allocation8 + $0x28] sm:$0xff]
    %v630 = vld [vmem:[#allocation8 + $0x30] sm:$0xff]
    %v631 = vld [vmem:[#allocation8 + $0x38] sm:$0xff]
    %632 = vset.pattern.permute.xlu0 6
    %633 = vperm.xlu0 %632, %v86
    %v634 = vpop.permute.xlu0 %633
    %636 = vset.pattern.permute.xlu0 6
    %637 = vperm.xlu0 %636, %v87
    %v638 = vpop.permute.xlu0 %637
    %640 = vset.pattern.permute.xlu0 6
    %641 = vperm.xlu0 %640, %v88
    %v642 = vpop.permute.xlu0 %641
    %644 = vset.pattern.permute.xlu0 6
    %645 = vperm.xlu0 %644, %v89
    %v646 = vpop.permute.xlu0 %645
    %648 = vset.pattern.permute.xlu0 6
    %649 = vperm.xlu0 %648, %v90
    %v650 = vpop.permute.xlu0 %649
    %652 = vset.pattern.permute.xlu0 6
    %653 = vperm.xlu0 %652, %v91
    %v654 = vpop.permute.xlu0 %653
    %656 = vset.pattern.permute.xlu0 6
    %657 = vperm.xlu0 %656, %v92
    %v658 = vpop.permute.xlu0 %657
    %660 = vset.pattern.permute.xlu0 6
    %661 = vperm.xlu0 %660, %v93
    %v662 = vpop.permute.xlu0 %661
    %v665 = vsel %vm438, %v624, 0
    %v668 = vsel %vm438, %v625, 0
    %v671 = vsel %vm438, %v626, 0
    %v674 = vsel %vm438, %v627, 0
    %v677 = vsel %vm438, %v628, 0
    %v680 = vsel %vm438, %v629, 0
    %v683 = vsel %vm438, %v630, 0
    %v686 = vsel %vm438, %v631, 0
    %688 = vmatprep.subr.mxu0 0.0
    %689 = vmatpush1.msra.mxu0 %v616
    %690 = vmatprep.subr.mxu0 0.0
    %691 = vmatpush1.msra.mxu0 %v617
    %692 = vmatprep.subr.mxu0 0.0
    %693 = vmatpush1.msra.mxu0 %v618
    %694 = vmatprep.subr.mxu0 0.0
    %695 = vmatpush1.msra.mxu0 %v619
    %696 = vmatprep.subr.mxu0 0.0
    %697 = vmatpush1.msra.mxu0 %v620
    %698 = vmatprep.subr.mxu0 0.0
    %699 = vmatpush1.msra.mxu0 %v621
    %700 = vmatprep.subr.mxu0 0.0
    %701 = vmatpush1.msra.mxu0 %v622
    %702 = vmatprep.subr.mxu0 0.0
    %703 = vmatpush1.msra.mxu0 %v623
    %704 = vmatprep.subr.mxu0 0.0
    %705 = vmatpush1.msra.mxu0 0.0
    %706 = vmatprep.subr.mxu0 0.0
    %707 = vmatpush1.msra.mxu0 0.0
    %708 = vmatprep.subr.mxu0 0.0
    %709 = vmatpush1.msra.mxu0 0.0
    %710 = vmatprep.subr.mxu0 0.0
    %711 = vmatpush1.msra.mxu0 0.0
    %712 = vmatprep.subr.mxu0 0.0
    %713 = vmatpush1.msra.mxu0 0.0
    %714 = vmatprep.subr.mxu0 0.0
    %715 = vmatpush1.msra.mxu0 0.0
    %716 = vmatprep.subr.mxu0 0.0
    %717 = vmatpush1.msra.mxu0 0.0
    %718 = vmatprep.subr.mxu0 0.0
    %719 = vmatpush1.msra.mxu0 0.0
    %720 = vmatprep.subr.mxu0 0.0
    %721 = vmatpush1.msra.mxu0 0.0
    %722 = vmatprep.subr.mxu0 0.0
    %723 = vmatpush1.msra.mxu0 0.0
    %724 = vmatprep.subr.mxu0 0.0
    %725 = vmatpush1.msra.mxu0 0.0
    %726 = vmatprep.subr.mxu0 0.0
    %727 = vmatpush1.msra.mxu0 0.0
    %728 = vmatprep.subr.mxu0 0.0
    %729 = vmatpush1.msra.mxu0 0.0
    %730 = vmatprep.subr.mxu0 0.0
    %731 = vmatpush1.msra.mxu0 0.0
    %732 = vmatprep.subr.mxu0 0.0
    %733 = vmatpush1.msra.mxu0 0.0
    %734 = vmatprep.subr.mxu0 0.0
    %735 = vmatpush1.msra.mxu0 0.0
    %736 = vmatprep.subr.mxu0 0.0
    %737 = vmatpush1.msra.mxu0 0.0
    %738 = vmatprep.subr.mxu0 0.0
    %739 = vmatpush1.msra.mxu0 0.0
    %740 = vmatprep.subr.mxu0 0.0
    %741 = vmatpush1.msra.mxu0 0.0
    %742 = vmatprep.subr.mxu0 0.0
    %743 = vmatpush1.msra.mxu0 0.0
    %744 = vmatprep.subr.mxu0 0.0
    %745 = vmatpush1.msra.mxu0 0.0
    %746 = vmatprep.subr.mxu0 0.0
    %747 = vmatpush1.msra.mxu0 0.0
    %748 = vmatprep.subr.mxu0 0.0
    %749 = vmatpush1.msra.mxu0 0.0
    %750 = vmatprep.subr.mxu0 0.0
    %751 = vmatpush1.msra.mxu0 0.0
    %752 = vmatprep.mubr.f32.mxu0 0.0
    %753 = vmatmul.mubr.f32.gmra.mrb[0].mxu0 %v665
    %v754 = vpop.f32.mrb[0].mxu0
    %v755 = vadd.f32 %v634, %v754
    %v756 = vpop.f32.mrb[0].mxu0
    %757 = vmatprep.mubr.f32.mxu0 0.0
    %758 = vmatmul.mubr.f32.gmra.mrb[0].mxu0 %v668
    %v759 = vpop.f32.mrb[0].mxu0
    %v760 = vadd.f32 %v638, %v759
    %v761 = vpop.f32.mrb[0].mxu0
    %762 = vmatprep.mubr.f32.mxu0 0.0
    %763 = vmatmul.mubr.f32.gmra.mrb[0].mxu0 %v671
    %v764 = vpop.f32.mrb[0].mxu0
    %v765 = vadd.f32 %v642, %v764
    %v766 = vpop.f32.mrb[0].mxu0
    %767 = vmatprep.mubr.f32.mxu0 0.0
    %768 = vmatmul.mubr.f32.gmra.mrb[0].mxu0 %v674
    %v769 = vpop.f32.mrb[0].mxu0
    %v770 = vadd.f32 %v646, %v769
    %v771 = vpop.f32.mrb[0].mxu0
    %772 = vmatprep.mubr.f32.mxu0 0.0
    %773 = vmatmul.mubr.f32.gmra.mrb[0].mxu0 %v677
    %v774 = vpop.f32.mrb[0].mxu0
    %v775 = vadd.f32 %v650, %v774
    %v776 = vpop.f32.mrb[0].mxu0
    %777 = vmatprep.mubr.f32.mxu0 0.0
    %778 = vmatmul.mubr.f32.gmra.mrb[0].mxu0 %v680
    %v779 = vpop.f32.mrb[0].mxu0
    %v780 = vadd.f32 %v654, %v779
    %v781 = vpop.f32.mrb[0].mxu0
    %782 = vmatprep.mubr.f32.mxu0 0.0
    %783 = vmatmul.mubr.f32.gmra.mrb[0].mxu0 %v683
    %v784 = vpop.f32.mrb[0].mxu0
    %v785 = vadd.f32 %v658, %v784
    %v786 = vpop.f32.mrb[0].mxu0
    %787 = vmatprep.mubr.f32.mxu0 0.0
    %788 = vmatmul.mubr.f32.gmra.mrb[0].mxu0 %v686
    %v789 = vpop.f32.mrb[0].mxu0
    %v790 = vadd.f32 %v662, %v789
    %v791 = vpop.f32.mrb[0].mxu0
    %792 = vdwg.mxu0
    %v793 = vxor.u32 %v755, 2147483648
    %v794 = vxor.u32 %v760, 2147483648
    %v795 = vxor.u32 %v765, 2147483648
    %v796 = vxor.u32 %v770, 2147483648
    %v797 = vxor.u32 %v775, 2147483648
    %v798 = vxor.u32 %v780, 2147483648
    %v799 = vxor.u32 %v785, 2147483648
    %v800 = vxor.u32 %v790, 2147483648
    %v801 = vmul.f32 %v793, 1.442695
    %v802 = vpow.pop %v801
    %v803 = vmul.f32 %v794, 1.442695
    %v804 = vpow.pop %v803
    %v805 = vmul.f32 %v795, 1.442695
    %v806 = vpow.pop %v805
    %v807 = vmul.f32 %v796, 1.442695
    %v808 = vpow.pop %v807
    %v809 = vmul.f32 %v797, 1.442695
    %v810 = vpow.pop %v809
    %v811 = vmul.f32 %v798, 1.442695
    %v812 = vpow.pop %v811
    %v813 = vmul.f32 %v799, 1.442695
    %v814 = vpow.pop %v813
    %v815 = vmul.f32 %v800, 1.442695
    %v816 = vpow.pop %v815
    %v817 = vadd.f32 %v802, 1.0
    %v818 = vadd.f32 %v804, 1.0
    %v819 = vadd.f32 %v806, 1.0
    %v820 = vadd.f32 %v808, 1.0
    %v821 = vadd.f32 %v810, 1.0
    %v822 = vadd.f32 %v812, 1.0
    %v823 = vadd.f32 %v814, 1.0
    %v824 = vadd.f32 %v816, 1.0
    %v825 = vrcp.pop %v817
    %v826 = vmul.f32 1.0, %v825
    %v827 = vrcp.pop %v818
    %v828 = vmul.f32 1.0, %v827
    %v829 = vrcp.pop %v819
    %v830 = vmul.f32 1.0, %v829
    %v831 = vrcp.pop %v820
    %v832 = vmul.f32 1.0, %v831
    %v833 = vrcp.pop %v821
    %v834 = vmul.f32 1.0, %v833
    %v835 = vrcp.pop %v822
    %v836 = vmul.f32 1.0, %v835
    %v837 = vrcp.pop %v823
    %v838 = vmul.f32 1.0, %v837
    %v839 = vrcp.pop %v824
    %v840 = vmul.f32 1.0, %v839
    %v841 = vmul.f32 %v755, %v826
    %v842 = vmul.f32 %v760, %v828
    %v843 = vmul.f32 %v765, %v830
    %v844 = vmul.f32 %v770, %v832
    %v845 = vmul.f32 %v775, %v834
    %v846 = vmul.f32 %v780, %v836
    %v847 = vmul.f32 %v785, %v838
    %v848 = vmul.f32 %v790, %v840
    %v849 = vld [vmem:[#allocation10] sm:$0x7]
    %850 = vset.pattern.permute.xlu0 7
    %851 = vperm.xlu0 %850, %v86
    %v852 = vpop.permute.xlu0 %851
    %v855 = vsel %vm438, %v849, 0
    %857 = vmatprep.subr.mxu0 0.0
    %858 = vmatpush1.msra.mxu0 %v841
    %859 = vmatprep.subr.mxu0 0.0
    %860 = vmatpush1.msra.mxu0 %v842
    %861 = vmatprep.subr.mxu0 0.0
    %862 = vmatpush1.msra.mxu0 %v843
    %863 = vmatprep.subr.mxu0 0.0
    %864 = vmatpush1.msra.mxu0 %v844
    %865 = vmatprep.subr.mxu0 0.0
    %866 = vmatpush1.msra.mxu0 %v845
    %867 = vmatprep.subr.mxu0 0.0
    %868 = vmatpush1.msra.mxu0 %v846
    %869 = vmatprep.subr.mxu0 0.0
    %870 = vmatpush1.msra.mxu0 %v847
    %871 = vmatprep.subr.mxu0 0.0
    %872 = vmatpush1.msra.mxu0 %v848
    %873 = vmatprep.subr.mxu0 0.0
    %874 = vmatpush1.msra.mxu0 0.0
    %875 = vmatprep.subr.mxu0 0.0
    %876 = vmatpush1.msra.mxu0 0.0
    %877 = vmatprep.subr.mxu0 0.0
    %878 = vmatpush1.msra.mxu0 0.0
    %879 = vmatprep.subr.mxu0 0.0
    %880 = vmatpush1.msra.mxu0 0.0
    %881 = vmatprep.subr.mxu0 0.0
    %882 = vmatpush1.msra.mxu0 0.0
    %883 = vmatprep.subr.mxu0 0.0
    %884 = vmatpush1.msra.mxu0 0.0
    %885 = vmatprep.subr.mxu0 0.0
    %886 = vmatpush1.msra.mxu0 0.0
    %887 = vmatprep.subr.mxu0 0.0
    %888 = vmatpush1.msra.mxu0 0.0
    %889 = vmatprep.subr.mxu0 0.0
    %890 = vmatpush1.msra.mxu0 0.0
    %891 = vmatprep.subr.mxu0 0.0
    %892 = vmatpush1.msra.mxu0 0.0
    %893 = vmatprep.subr.mxu0 0.0
    %894 = vmatpush1.msra.mxu0 0.0
    %895 = vmatprep.subr.mxu0 0.0
    %896 = vmatpush1.msra.mxu0 0.0
    %897 = vmatprep.subr.mxu0 0.0
    %898 = vmatpush1.msra.mxu0 0.0
    %899 = vmatprep.subr.mxu0 0.0
    %900 = vmatpush1.msra.mxu0 0.0
    %901 = vmatprep.subr.mxu0 0.0
    %902 = vmatpush1.msra.mxu0 0.0
    %903 = vmatprep.subr.mxu0 0.0
    %904 = vmatpush1.msra.mxu0 0.0
    %905 = vmatprep.subr.mxu0 0.0
    %906 = vmatpush1.msra.mxu0 0.0
    %907 = vmatprep.subr.mxu0 0.0
    %908 = vmatpush1.msra.mxu0 0.0
    %909 = vmatprep.subr.mxu0 0.0
    %910 = vmatpush1.msra.mxu0 0.0
    %911 = vmatprep.subr.mxu0 0.0
    %912 = vmatpush1.msra.mxu0 0.0
    %913 = vmatprep.subr.mxu0 0.0
    %914 = vmatpush1.msra.mxu0 0.0
    %915 = vmatprep.subr.mxu0 0.0
    %916 = vmatpush1.msra.mxu0 0.0
    %917 = vmatprep.subr.mxu0 0.0
    %918 = vmatpush1.msra.mxu0 0.0
    %919 = vmatprep.subr.mxu0 0.0
    %920 = vmatpush1.msra.mxu0 0.0
    %921 = vmatprep.mubr.f32.mxu0 0.0
    %922 = vmatmul.mubr.f32.gmra.mrb[0].mxu0 %v855
    %v923 = vpop.f32.mrb[0].mxu0
    %v924 = vadd.f32 %v852, %v923
    %v925 = vpop.f32.mrb[0].mxu0
    %926 = vdwg.mxu0
    %927 = vst [vmem:[#allocation11] sm:$0x7] %v924
    // Predicated region
    $region42: #{tpu_custom_call.1} parent=1 // pred_check
      _
    $region43: #{tpu_custom_call.1} parent=1 // pred_check_branch
      %929 = sbr.rel (0) target = $region45
    $region44: #{tpu_custom_call.1} parent=1 // pred_region
      %s931 = ssub.s32 64, 64
      %932 = vsyncadd [#allocation4], %s931
      %s934 = sshll.u32 [#allocation11], 4
      %s935 = int_to_ptr.vmem [resolvable:$true] %s934
      %937 = dma.vmem_to_hbm [thread:$0]  %s935, 64, %s5, [#allocation4]
    $region45: #{tpu_custom_call.1} parent=1 // pred_fallthru
      _
    // Predicated region
    $region46: #{tpu_custom_call.1} parent=1 // pred_check
      _
    $region47: #{tpu_custom_call.1} parent=1 // pred_check_branch
      %939 = sbr.rel (0) target = $region49
    $region48: #{tpu_custom_call.1} parent=1 // pred_region
      %940 = dma.done [#allocation4], 64
    $region49: #{tpu_custom_call.1} parent=1 // pred_fallthru
      _
    %941 = vsyncpa [#allocation3], 1
    %942 = vsyncpa [#allocation6], 1
    %943 = vsyncpa [#allocation9], 1
    %944 = vsyncpa [#allocation4], 1

</llo_original>
